<compile_context>
chip_gen: v6e
topology: v6e:2x2x1
jax: 0.10.0
libtpu: 0.0.40
codegen_flags: <defaults>
</compile_context>

<pallas_src>
import jax
import jax.numpy as jnp
from jax import lax
from jax.experimental import pallas as pl
from jax.experimental.pallas import tpu as pltpu

# ------------------------------- config --------------------------------------
B = 2                 # batch
T_IN = 16             # input time steps (conv "width"; NCHW height is 1)
C_IN = 32             # in_conv_dim
C_OUT = 128           # out_conv_dim
K = 3                 # tdnn kernel size
DIL = 2               # tdnn dilation
T_OUT = T_IN - DIL * (K - 1)   # valid-conv output length (12)
M = B * T_OUT                  # rows fed to the MXU (24, multiple of 8)
KC = K * C_IN                  # im2col contraction dim (96)


# -------------------------------- kernel --------------------------------------
def tdnn_kernel(x_ref, w_ref, b_ref, o_ref):
    """x_ref: (M, K*C_IN)      im2col patches (batch folded into the rows).
       w_ref: (K*C_IN, C_OUT)  transposed nn.Linear weight.
       b_ref: (1, C_OUT)       bias (sublane-broadcast add).
       o_ref: (M, C_OUT)       relu(x @ w + b)."""
    acc = jnp.dot(x_ref[...], w_ref[...], preferred_element_type=jnp.float32)
    o_ref[...] = jnp.maximum(acc + b_ref[...], 0.0)


# -------------------------------- wrapper --------------------------------------
def tdnn_layer(hidden_states, w_lin, b_lin):
    """hidden_states: (B, C_IN, 1, T_IN) NCHW (as in the PyTorch module).
       w_lin: (C_OUT, K*C_IN) nn.Linear weight;  b_lin: (C_OUT,).
       Returns (B, C_OUT, 1, T_OUT) = relu(conv2d(x, w, b, dilation=DIL))."""
    # im2col: patches[b, t, k*C_IN + c] = x[b, c, t + k*DIL]  (matches the
    # PyTorch weight.view(O, K, C).transpose(1, 2) index mapping k*C_IN + c).
    x_btc = jnp.transpose(hidden_states[:, :, 0, :], (0, 2, 1))        # (B, T, C)
    patches = jnp.concatenate(
        [x_btc[:, k * DIL : k * DIL + T_OUT, :] for k in range(K)], axis=-1)
    x_im2col = patches.reshape(M, KC)                                   # (24, 96)
    w_mat = w_lin.T                                                     # (96, 128)
    bias = b_lin.reshape(1, C_OUT)

    cost = pl.CostEstimate(
        flops=2 * M * KC * C_OUT,
        transcendentals=0,
        bytes_accessed=4 * (M * KC + KC * C_OUT + C_OUT + M * C_OUT),
    )

    y_flat = pl.pallas_call(
        tdnn_kernel,
        out_shape=jax.ShapeDtypeStruct((M, C_OUT), jnp.float32),
        in_specs=[pl.BlockSpec(memory_space=pltpu.MemorySpace.VMEM)] * 3,
        out_specs=pl.BlockSpec(memory_space=pltpu.MemorySpace.VMEM),
        cost_estimate=cost,
    )(x_im2col, w_mat, bias)

    y = y_flat.reshape(B, T_OUT, C_OUT)                                # (B, T, O)
    return jnp.transpose(y, (0, 2, 1))[:, :, None, :]                  # (B, O, 1, T)


# --------------------------- pure-JAX reference --------------------------------
def reference_tdnn(hidden_states, w_lin, b_lin):
    # Mirrors the PyTorch forward exactly (weight view/transpose + dilated conv2d).
    w_conv = jnp.transpose(w_lin.reshape(C_OUT, K, C_IN), (0, 2, 1))[:, :, None, :]
    out = lax.conv_general_dilated(
        hidden_states, w_conv,
        window_strides=(1, 1), padding="VALID",
        rhs_dilation=(1, DIL),
        dimension_numbers=("NCHW", "OIHW", "NCHW"))
    out = out + b_lin.reshape(1, C_OUT, 1, 1)
    return jnp.maximum(out, 0.0)


# ----------------------------------- main --------------------------------------
if __name__ == "__main__":
    key = jax.random.PRNGKey(0)
    kx, kw, kb = jax.random.split(key, 3)
    x = jax.random.normal(kx, (B, C_IN, 1, T_IN), dtype=jnp.float32)
    w_lin = (0.05 * jax.random.normal(kw, (C_OUT, K * C_IN))).astype(jnp.float32)
    b_lin = (0.05 * jax.random.normal(kb, (C_OUT,))).astype(jnp.float32)

    out = tdnn_layer(x, w_lin, b_lin)
    out = jax.block_until_ready(out)

    ref = reference_tdnn(x, w_lin, b_lin)
    assert out.shape == (B, C_OUT, 1, T_OUT), out.shape
    err = float(jnp.max(jnp.abs(out - ref)))
    assert jnp.allclose(out, ref, atol=1e-4, rtol=1e-4), f"max abs err = {err}"

    print("KERNEL_OK")
</pallas_src>

<mosaic_0001>
module attributes {stable_mosaic.version = 11 : i64} {
  func.func @tdnn_kernel(%arg0: memref<24x96xf32, #tpu.memory_space<vmem>>, %arg1: memref<96x128xf32, #tpu.memory_space<vmem>>, %arg2: memref<1x128xf32, #tpu.memory_space<vmem>>, %arg3: memref<24x128xf32, #tpu.memory_space<vmem>>) attributes {dimension_semantics = [], scalar_prefetch = 0 : i64, scratch_operands = 0 : i64, tpu.core_type = #tpu.core_type<tc>} {
    %c0 = arith.constant 0 : index
    %c0_0 = arith.constant 0 : index
    %0 = vector.load %arg0[%c0, %c0_0] : memref<24x96xf32, #tpu.memory_space<vmem>>, vector<24x96xf32>
    %c0_1 = arith.constant 0 : index
    %c0_2 = arith.constant 0 : index
    %1 = vector.load %arg1[%c0_1, %c0_2] : memref<96x128xf32, #tpu.memory_space<vmem>>, vector<96x128xf32>
    %cst = arith.constant dense<0.000000e+00> : vector<24x128xf32>
    %2 = tpu.matmul %0, %1, %cst {dimension_numbers = #tpu.dot_dimension_numbers<[1], [0], [0], [1], [0, 0, 1, 1], [], []>} : vector<24x96xf32>, vector<96x128xf32>, vector<24x128xf32> -> vector<24x128xf32>
    %c0_3 = arith.constant 0 : index
    %c0_4 = arith.constant 0 : index
    %3 = vector.load %arg2[%c0_3, %c0_4] : memref<1x128xf32, #tpu.memory_space<vmem>>, vector<1x128xf32>
    %4 = vector.broadcast %3 : vector<1x128xf32> to vector<24x128xf32>
    %5 = arith.addf %2, %4 : vector<24x128xf32>
    %cst_5 = arith.constant 0.000000e+00 : f32
    %6 = vector.broadcast %cst_5 : f32 to vector<24x128xf32>
    %7 = arith.maximumf %5, %6 : vector<24x128xf32>
    %c0_6 = arith.constant 0 : index
    %c0_7 = arith.constant 0 : index
    %8 = vector.load %arg3[%c0_6, %c0_7] : memref<24x128xf32, #tpu.memory_space<vmem>>, vector<24x128xf32>
    tpu.vector_store %arg3[%c0_6, %c0_7], %7 {strides = array<i32>} : memref<24x128xf32, #tpu.memory_space<vmem>>, vector<24x128xf32>,
    return
  }
}

</mosaic_0001>

<llo_original>
// kernel: tpu_custom_call.1
$region0: #{tpu_custom_call.1}
  #allocation0 [shape = 'u32[]', space=smem, size = 0x4, offset = 0x4, fixed_abs, tag = 'smem constant byte address 0x4 - core index']
  #allocation1 [shape = 'u32[144,128]{1,0:T(1,128)}', space=vmem, size = 0x12000, scoped, tag = 'internal scratch']
  %s0 = inlined_call_operand.hbm [shape: f32[24,96], index: 0, kind: input, shape index: {}]
  %s1 = inlined_call_operand.hbm [shape: f32[96,128], index: 1, kind: input, shape index: {}]
  %s2 = inlined_call_operand.vmem [shape: f32[1,128], index: 2, kind: input, shape index: {}]
  %s3 = inlined_call_operand.hbm [shape: f32[24,128], index: 3, kind: output, shape index: {}]
  %s4 = sld [smem:[#allocation0]]
  $region30: #{tpu_custom_call.1} parent=0
    _
  %s6 = ssub.s32 1, %s4
  %s7 = scalar_select 0, %s6, %s4
  $region1: #{tpu_custom_call.1} parent=0
    #allocation2 [shape = 'u8[12288]{0}', space=vmem, size = 0x3000, scoped, tag = 'input window, operand 0, single buffered']
    #allocation3 [shape = 's32[1]{0}', space=sflag, size = 0x4, scoped, tag = 'scoped memory for tpu_custom_call.1']
    #allocation4 [shape = 's32[1]{0}', space=sflag, size = 0x4, scoped, tag = 'scoped memory for tpu_custom_call.1']
    #allocation5 [shape = 'u8[49152]{0}', space=vmem, size = 0xc000, scoped, tag = 'input window, operand 1, single buffered']
    #allocation6 [shape = 's32[1]{0}', space=sflag, size = 0x4, scoped, tag = 'scoped memory for tpu_custom_call.1']
    #allocation7 [shape = 'u8[12288]{0}', space=vmem, size = 0x3000, scoped, tag = 'output window, operand 0, single buffered']
    %8 = vsyncpa [#allocation3], 0
    %9 = vsyncpa [#allocation6], 0
    %10 = vsyncpa [#allocation4], 0
    // Predicated region
    $region2: #{tpu_custom_call.1} parent=1 // pred_check
      _
    $region3: #{tpu_custom_call.1} parent=1 // pred_check_branch
      %12 = sbr.rel (0) target = $region5
    $region4: #{tpu_custom_call.1} parent=1 // pred_region
      %s14 = ssub.s32 384, 384
      %15 = vsyncadd [#allocation3], %s14
      %s16 = sshll.u32 [#allocation2], 4
      %s17 = int_to_ptr.vmem [resolvable:$true] %s16
      %22 = dma.hbm_to_vmem [thread:$0]  %s0, 384, %s17, [#allocation3], 128, 128, 8
    $region5: #{tpu_custom_call.1} parent=1 // pred_fallthru
      _
    // Predicated region
    $region6: #{tpu_custom_call.1} parent=1 // pred_check
      _
    $region7: #{tpu_custom_call.1} parent=1 // pred_check_branch
      %24 = sbr.rel (0) target = $region9
    $region8: #{tpu_custom_call.1} parent=1 // pred_region
      %s26 = ssub.s32 1536, 1536
      %27 = vsyncadd [#allocation6], %s26
      %s28 = sshll.u32 [#allocation5], 4
      %s29 = int_to_ptr.vmem [resolvable:$true] %s28
      %34 = dma.hbm_to_vmem [thread:$0]  %s1, 1536, %s29, [#allocation6], 128, 128, 8
    $region9: #{tpu_custom_call.1} parent=1 // pred_fallthru
      _
    // Predicated region
    $region10: #{tpu_custom_call.1} parent=1 // pred_check
      _
    $region11: #{tpu_custom_call.1} parent=1 // pred_check_branch
      %36 = sbr.rel (0) target = $region13
    $region12: #{tpu_custom_call.1} parent=1 // pred_region
      _
    $region13: #{tpu_custom_call.1} parent=1 // pred_fallthru
      _
    // Predicated region
    $region14: #{tpu_custom_call.1} parent=1 // pred_check
      _
    $region15: #{tpu_custom_call.1} parent=1 // pred_check_branch
      %38 = sbr.rel (0) target = $region17
    $region16: #{tpu_custom_call.1} parent=1 // pred_region
      %39 = dma.done [#allocation3], 384
    $region17: #{tpu_custom_call.1} parent=1 // pred_fallthru
      _
    // Predicated region
    $region18: #{tpu_custom_call.1} parent=1 // pred_check
      _
    $region19: #{tpu_custom_call.1} parent=1 // pred_check_branch
      %41 = sbr.rel (0) target = $region21
    $region20: #{tpu_custom_call.1} parent=1 // pred_region
      %42 = dma.done [#allocation6], 1536
    $region21: #{tpu_custom_call.1} parent=1 // pred_fallthru
      _
    %v43 = vld [vmem:[#allocation2] sm:$0xff]
    %v44 = vld [vmem:[#allocation2 + $0x8] sm:$0xff]
    %v45 = vld [vmem:[#allocation2 + $0x10] sm:$0xff]
    %v46 = vld [vmem:[#allocation5] sm:$0xff]
    %v47 = vld [vmem:[#allocation5 + $0x8] sm:$0xff]
    %v48 = vld [vmem:[#allocation5 + $0x10] sm:$0xff]
    %v49 = vld [vmem:[#allocation5 + $0x18] sm:$0xff]
    %v50 = vld [vmem:[#allocation5 + $0x20] sm:$0xff]
    %v51 = vld [vmem:[#allocation5 + $0x28] sm:$0xff]
    %v52 = vld [vmem:[#allocation5 + $0x30] sm:$0xff]
    %v53 = vld [vmem:[#allocation5 + $0x38] sm:$0xff]
    %v54 = vld [vmem:[#allocation5 + $0x40] sm:$0xff]
    %v55 = vld [vmem:[#allocation5 + $0x48] sm:$0xff]
    %v56 = vld [vmem:[#allocation5 + $0x50] sm:$0xff]
    %v57 = vld [vmem:[#allocation5 + $0x58] sm:$0xff]
    %v58 = vld [vmem:[%s2] sm:$0x1]
    %v60 = vlaneseq
    %v61 = vshrl.u32 %v60, 7
    %v62 = vsub.s32 0, %v61
    %v63 = vrot.slane %v58, %v62
    %vm65 = vcmask 785408
    %v67 = vsel %vm65, %v43, 0
    %v70 = vsel %vm65, %v44, 0
    %v73 = vsel %vm65, %v45, 0
    %75 = vmatprep.subr.mxu0 0.0
    %76 = vmatpush1.msra.mxu0 0.0
    %77 = vmatprep.subr.mxu0 0.0
    %78 = vmatpush1.msra.mxu0 0.0
    %79 = vmatprep.subr.mxu0 0.0
    %80 = vmatpush1.msra.mxu0 0.0
    %81 = vmatprep.subr.mxu0 0.0
    %82 = vmatpush1.msra.mxu0 0.0
    %83 = vmatprep.subr.mxu0 0.0
    %84 = vmatpush1.msra.mxu0 %v57
    %85 = vmatprep.subr.mxu0 0.0
    %86 = vmatpush1.msra.mxu0 %v56
    %87 = vmatprep.subr.mxu0 0.0
    %88 = vmatpush1.msra.mxu0 %v55
    %89 = vmatprep.subr.mxu0 0.0
    %90 = vmatpush1.msra.mxu0 %v54
    %91 = vmatprep.subr.mxu0 0.0
    %92 = vmatpush1.msra.mxu0 %v53
    %93 = vmatprep.subr.mxu0 0.0
    %94 = vmatpush1.msra.mxu0 %v52
    %95 = vmatprep.subr.mxu0 0.0
    %96 = vmatpush1.msra.mxu0 %v51
    %97 = vmatprep.subr.mxu0 0.0
    %98 = vmatpush1.msra.mxu0 %v50
    %99 = vmatprep.subr.mxu0 0.0
    %100 = vmatpush1.msra.mxu0 %v49
    %101 = vmatprep.subr.mxu0 0.0
    %102 = vmatpush1.msra.mxu0 %v48
    %103 = vmatprep.subr.mxu0 0.0
    %104 = vmatpush1.msra.mxu0 %v47
    %105 = vmatprep.subr.mxu0 0.0
    %106 = vmatpush1.msra.mxu0 %v46
    %107 = vmatprep.subr.mxu0 0.0
    %108 = vmatpush2.msra.mxu0 0.0
    %109 = vmatprep.subr.mxu0 0.0
    %110 = vmatpush2.msra.mxu0 0.0
    %111 = vmatprep.subr.mxu0 0.0
    %112 = vmatpush2.msra.mxu0 0.0
    %113 = vmatprep.subr.mxu0 0.0
    %114 = vmatpush2.msra.mxu0 0.0
    %115 = vmatprep.subr.mxu0 0.0
    %116 = vmatpush2.msra.mxu0 0.0
    %117 = vmatprep.subr.mxu0 0.0
    %118 = vmatpush2.msra.mxu0 0.0
    %119 = vmatprep.subr.mxu0 0.0
    %120 = vmatpush2.msra.mxu0 0.0
    %121 = vmatprep.subr.mxu0 0.0
    %122 = vmatpush2.msra.mxu0 0.0
    %123 = vmatprep.subr.mxu0 0.0
    %124 = vmatpush2.msra.mxu0 0.0
    %125 = vmatprep.subr.mxu0 0.0
    %126 = vmatpush2.msra.mxu0 0.0
    %127 = vmatprep.subr.mxu0 0.0
    %128 = vmatpush2.msra.mxu0 0.0
    %129 = vmatprep.subr.mxu0 0.0
    %130 = vmatpush2.msra.mxu0 0.0
    %131 = vmatprep.subr.mxu0 0.0
    %132 = vmatpush2.msra.mxu0 0.0
    %133 = vmatprep.subr.mxu0 0.0
    %134 = vmatpush2.msra.mxu0 0.0
    %135 = vmatprep.subr.mxu0 0.0
    %136 = vmatpush2.msra.mxu0 0.0
    %137 = vmatprep.subr.mxu0 0.0
    %138 = vmatpush2.msra.mxu0 0.0
    %139 = vmatprep.mubr.f32.mxu0 0.0
    %140 = vmatmul.mubr.f32.gmra.mxu0 %v67
    %v141 = vpop.f32.mrf.mxu0
    %v142 = vadd.f32 %v63, %v141
    %v143 = vpop.f32.mrf.mxu0
    %144 = vmatprep.mubr.f32.mxu0 0.0
    %145 = vmatmul.mubr.f32.gmra.mxu0 %v70
    %v146 = vpop.f32.mrf.mxu0
    %v147 = vadd.f32 %v63, %v146
    %v148 = vpop.f32.mrf.mxu0
    %149 = vmatprep.mubr.f32.mxu0 0.0
    %150 = vmatmul.mubr.f32.gmra.mxu0 %v73
    %v151 = vpop.f32.mrf.mxu0
    %v152 = vadd.f32 %v63, %v151
    %v153 = vpop.f32.mrf.mxu0
    %154 = vdwg.mxu0
    %v155 = vmax.f32 %v142, 0.0
    %v156 = vmax.f32 %v147, 0.0
    %v157 = vmax.f32 %v152, 0.0
    %158 = vst [vmem:[#allocation7] sm:$0xff] %v155
    %159 = vst [vmem:[#allocation7 + $0x8] sm:$0xff] %v156
    %160 = vst [vmem:[#allocation7 + $0x10] sm:$0xff] %v157
    // Predicated region
    $region22: #{tpu_custom_call.1} parent=1 // pred_check
      _
    $region23: #{tpu_custom_call.1} parent=1 // pred_check_branch
      %162 = sbr.rel (0) target = $region25
    $region24: #{tpu_custom_call.1} parent=1 // pred_region
      %s164 = ssub.s32 384, 384
      %165 = vsyncadd [#allocation4], %s164
      %s166 = sshll.u32 [#allocation7], 4
      %s167 = int_to_ptr.vmem [resolvable:$true] %s166
      %172 = dma.vmem_to_hbm [thread:$0]  %s167, 384, %s3, [#allocation4], 128, 128, 8
    $region25: #{tpu_custom_call.1} parent=1 // pred_fallthru
      _
    // Predicated region
    $region26: #{tpu_custom_call.1} parent=1 // pred_check
      _
    $region27: #{tpu_custom_call.1} parent=1 // pred_check_branch
      %174 = sbr.rel (0) target = $region29
    $region28: #{tpu_custom_call.1} parent=1 // pred_region
      %175 = dma.done [#allocation4], 384
    $region29: #{tpu_custom_call.1} parent=1 // pred_fallthru
      _
    %176 = vsyncpa [#allocation3], 1
    %177 = vsyncpa [#allocation6], 1
    %178 = vsyncpa [#allocation4], 1

</llo_original>
